<compile_context>
chip_gen: v7x
topology: tpu7x:2x2x1
jax: 0.10.0
libtpu: 0.0.40
codegen_flags: <defaults>
</compile_context>

<pallas_src>
import functools

import jax
import jax.numpy as jnp
from jax.experimental import pallas as pl
from jax.experimental.pallas import tpu as pltpu


# ---------------------------------------------------------------------------
# Fused Pallas kernel: conv1(+skip conv) + BN -> ReLU -> conv2 + BN,
# residual add, output ReLU — Nb batch elements per grid step.
# All activations stay in the packed lane-dense (rows, W*C) layout.
# ---------------------------------------------------------------------------
def _residual_fused_kernel(x_ref, w1s_ref, b1s_ref, w2_ref, b2_ref, o_ref,
                           xp_ref, hp_ref, *, has_skip):
    Nb, H, WCin = x_ref.shape
    WCo = w2_ref.shape[-1]
    M = Nb * H

    def stage(p_ref, value, width):
        # Write `value` into the row-padded scratch; zero ONLY the two halo
        # rows (done every step: megacore-safe, scratch is per-core).
        p_ref[:, pl.ds(0, 1), :] = jnp.zeros((Nb, 1, width), p_ref.dtype)
        p_ref[:, pl.ds(H + 1, 1), :] = jnp.zeros((Nb, 1, width), p_ref.dtype)
        p_ref[:, pl.ds(1, H), :] = value

    def band_matmul(p_ref, w_ref, width, n_out):
        # y = sum_kh rowshift(act, kh-1) @ banded_w[kh]   (3x3 SAME conv)
        acc = jnp.zeros((M, n_out), jnp.float32)
        for kh in range(3):
            tap = p_ref[:, pl.ds(kh, H), :].reshape(M, width)
            acc = acc + jnp.dot(tap.astype(jnp.bfloat16), w_ref[kh],
                                preferred_element_type=jnp.float32)
        return acc

    # ---- conv1 (+ merged skip conv), BN scale already folded into weights ---
    stage(xp_ref, x_ref[...], WCin)
    n_merged = w1s_ref.shape[-1]
    y1 = band_matmul(xp_ref, w1s_ref, WCin, n_merged) + b1s_ref[...]

    h = jnp.maximum(y1[:, :WCo], 0.0)            # conv1 + BN + ReLU
    if has_skip:
        skip = y1[:, WCo:]                       # skip conv + BN (no ReLU)
    else:
        skip = x_ref[...].reshape(M, WCo).astype(jnp.float32)   # identity

    # ---- conv2 + BN ----
    stage(hp_ref, h.reshape(Nb, H, WCo), WCo)
    y2 = band_matmul(hp_ref, w2_ref, WCo, WCo) + b2_ref[...]

    # ---- residual add + output ReLU, lane-dense (Nb, H, W*Cout) store ----
    out = jnp.maximum(y2 + skip, 0.0)
    o_ref[...] = out.reshape(Nb, H, WCo).astype(o_ref.dtype)


# ---------------------------------------------------------------------------
# Wrapper-side weight prep
# ---------------------------------------------------------------------------
def _band_conv3x3(w_hwio, width):
    """(3, 3, Cin, Co) HWIO kernel -> (3, W*Cin, W*Co) block-banded matrices.

    banded[kh][(wi*Cin + ci), (wo*Co + co)] = w[kh, wi - wo + 1, ci, co]
    (zero outside the +/-1 column band), so a 3x3 SAME conv becomes
        y = sum_kh rowshift(x_lane_dense, kh-1) @ banded[kh].
    """
    _, _, cin, co = w_hwio.shape
    wi = jnp.arange(width)[:, None]
    wo = jnp.arange(width)[None, :]
    kw = wi - wo + 1                                          # (W, W)
    valid = ((kw >= 0) & (kw <= 2)).astype(w_hwio.dtype)
    b = w_hwio[:, jnp.clip(kw, 0, 2)]                         # (3, W, W, Cin, Co)
    b = b * valid[None, :, :, None, None]
    b = jnp.transpose(b, (0, 1, 3, 2, 4))                     # (3, Wi, Cin, Wo, Co)
    return b.reshape(3, width * cin, width * co)


def residual_forward(x_nhwc, params):
    """Fused forward pass of the Residual module (stride=1). x: (N,H,W,Cin)."""
    N, H, W, Cin = x_nhwc.shape
    Cout = params["w1"].shape[-1]
    has_skip = params["w_skip"] is not None
    if not has_skip:
        assert Cin == Cout, "identity skip requires in_channels == out_channels"

    WCin, WCo = W * Cin, W * Cout

    def prep(w, s, b):
        # Fold the BN scale into the conv weights (trace-time constant fold),
        # band them for the lane-dense row matmuls, tile the bias per lane.
        w_sc = w * s.reshape(1, 1, 1, Cout)
        banded = _band_conv3x3(w_sc, W).astype(jnp.bfloat16)
        bias = jnp.tile(b.reshape(Cout), (W,)).reshape(1, WCo).astype(jnp.float32)
        return banded, bias

    w1b, b1t = prep(params["w1"], params["s1"], params["b1"])
    w2b, b2t = prep(params["w2"], params["s2"], params["b2"])
    if has_skip:
        wsb, bst = prep(params["w_skip"], params["s_skip"], params["b_skip"])
        w1s = jnp.concatenate([w1b, wsb], axis=-1)        # (3, W*Cin, 2*W*Cout)
        b1s = jnp.concatenate([b1t, bst], axis=-1)        # (1, 2*W*Cout)
    else:
        w1s, b1s = w1b, b1t
    n_merged = w1s.shape[-1]

    # Batch blocking: fold Nb images into the matmul M dim per step, but keep
    # >= 2 grid steps when possible so both v7x TensorCores get work.
    n_steps = 2 if (N >= 2 and N % 2 == 0) else N
    Nb = N // n_steps

    x_ld = x_nhwc.reshape(N, H, WCin)       # lane-dense view, free reshape

    out = pl.pallas_call(
        functools.partial(_residual_fused_kernel, has_skip=has_skip),
        out_shape=jax.ShapeDtypeStruct((N, H, WCo), x_nhwc.dtype),
        grid=(n_steps,),
        in_specs=[
            pl.BlockSpec((Nb, H, WCin), lambda n: (n, 0, 0)),
            pl.BlockSpec((3, WCin, n_merged), lambda n: (0, 0, 0)),
            pl.BlockSpec((1, n_merged), lambda n: (0, 0)),
            pl.BlockSpec((3, WCo, WCo), lambda n: (0, 0, 0)),
            pl.BlockSpec((1, WCo), lambda n: (0, 0)),
        ],
        # Lane-dense output: last dim W*Cout (=128 here) -> unmasked stores.
        out_specs=pl.BlockSpec((Nb, H, WCo), lambda n: (n, 0, 0)),
        scratch_shapes=[
            pltpu.VMEM((Nb, H + 2, WCin), jnp.float32),   # row-padded x
            pltpu.VMEM((Nb, H + 2, WCo), jnp.float32),    # row-padded h
        ],
        compiler_params=pltpu.CompilerParams(
            dimension_semantics=("parallel",),            # batch elems indep.
            vmem_limit_bytes=32 * 1024 * 1024),
    )(x_ld, w1s, b1s, w2b, b2t)
    return out.reshape(N, H, W, Cout)


# ---------------------------------------------------------------------------
# Parameter construction (deterministic, synthetic) + BN folding
# ---------------------------------------------------------------------------
def fold_bn(gamma, beta, mean, var, eps=1e-5):
    scale = gamma / jnp.sqrt(var + eps)
    bias = beta - mean * scale
    return scale.reshape(1, -1), bias.reshape(1, -1)


def make_params(key, c_in, c_out):
    ks = jax.random.split(key, 12)

    def bn_params(k0, k1, k2, k3, c):
        gamma = jax.random.normal(k0, (c,), jnp.float32) * 0.1 + 1.0
        beta = jax.random.normal(k1, (c,), jnp.float32) * 0.1
        mean = jax.random.normal(k2, (c,), jnp.float32) * 0.1
        var = jax.nn.softplus(jax.random.normal(k3, (c,), jnp.float32)) + 0.5
        return fold_bn(gamma, beta, mean, var)

    w1 = jax.random.normal(ks[0], (3, 3, c_in, c_out), jnp.float32) * 0.1
    s1, b1 = bn_params(ks[1], ks[2], ks[3], ks[4], c_out)
    w2 = jax.random.normal(ks[5], (3, 3, c_out, c_out), jnp.float32) * 0.1
    s2, b2 = bn_params(ks[6], ks[7], ks[8], ks[9], c_out)

    params = dict(w1=w1, s1=s1, b1=b1, w2=w2, s2=s2, b2=b2,
                  w_skip=None, s_skip=None, b_skip=None)
    if c_in != c_out:  # skip branch is conv3x3 + BN
        w_skip = jax.random.normal(ks[10], (3, 3, c_in, c_out), jnp.float32) * 0.1
        s_skip, b_skip = bn_params(ks[11], ks[1], ks[5], ks[9], c_out)
        params.update(w_skip=w_skip, s_skip=s_skip, b_skip=b_skip)
    return params


# ---------------------------------------------------------------------------
# Pure-JAX reference (verification only)
# ---------------------------------------------------------------------------
def _ref_conv_bn(x, w, scale, bias, relu):
    y = jax.lax.conv_general_dilated(
        x, w, window_strides=(1, 1), padding="SAME",
        dimension_numbers=("NHWC", "HWIO", "NHWC"))
    y = y * scale.reshape(1, 1, 1, -1) + bias.reshape(1, 1, 1, -1)
    return jnp.maximum(y, 0.0) if relu else y


def _ref_residual(x, params):
    h = _ref_conv_bn(x, params["w1"], params["s1"], params["b1"], relu=True)
    b1 = _ref_conv_bn(h, params["w2"], params["s2"], params["b2"], relu=False)
    if params["w_skip"] is None:
        skip = x
    else:
        skip = _ref_conv_bn(x, params["w_skip"], params["s_skip"],
                            params["b_skip"], relu=False)
    return jnp.maximum(b1 + skip, 0.0)


# ---------------------------------------------------------------------------
if __name__ == "__main__":
    N, C_IN, C_OUT, H, W = 2, 4, 8, 16, 16

    key = jax.random.PRNGKey(0)
    k_x, k_p, k_x2, k_p2 = jax.random.split(key, 4)

    # PyTorch-convention NCHW input, then move to NHWC for the kernel.
    x_nchw = jax.random.normal(k_x, (N, C_IN, H, W), jnp.float32)
    x_nhwc = jnp.transpose(x_nchw, (0, 2, 3, 1))

    # --- case 1: c_in != c_out (conv+BN skip branch, merged into conv1) ---
    params = make_params(k_p, C_IN, C_OUT)
    out = jax.block_until_ready(residual_forward(x_nhwc, params))
    ref = _ref_residual(x_nhwc, params)
    assert out.shape == (N, H, W, C_OUT)
    # bf16 MXU operands (f32 accumulate) -> looser tolerance vs the f32 reference.
    assert jnp.allclose(out, ref, atol=5e-2, rtol=5e-2), "mismatch (skip conv)"

    # --- case 2: c_in == c_out (identity skip branch) ---
    x2_nhwc = jnp.transpose(
        jax.random.normal(k_x2, (N, C_OUT, H, W), jnp.float32), (0, 2, 3, 1))
    params2 = make_params(k_p2, C_OUT, C_OUT)
    out2 = jax.block_until_ready(residual_forward(x2_nhwc, params2))
    ref2 = _ref_residual(x2_nhwc, params2)
    assert jnp.allclose(out2, ref2, atol=5e-2, rtol=5e-2), "mismatch (identity skip)"

    # Back to NCHW if the caller wants PyTorch layout.
    _ = jnp.transpose(out, (0, 3, 1, 2))

    print("KERNEL_OK")
</pallas_src>

<mosaic_0001>
module attributes {stable_mosaic.version = 11 : i64} {
  func.func @_residual_fused_kernel(%arg0: i32, %arg1: memref<1x16x64xf32, #tpu.memory_space<vmem>>, %arg2: memref<3x64x256xbf16, #tpu.memory_space<vmem>>, %arg3: memref<1x256xf32, #tpu.memory_space<vmem>>, %arg4: memref<3x128x128xbf16, #tpu.memory_space<vmem>>, %arg5: memref<1x128xf32, #tpu.memory_space<vmem>>, %arg6: memref<1x16x128xf32, #tpu.memory_space<vmem>>, %arg7: memref<1x18x64xf32, #tpu.memory_space<vmem>>, %arg8: memref<1x18x128xf32, #tpu.memory_space<vmem>>) attributes {dimension_semantics = [#tpu.dimension_semantics<parallel>], iteration_bounds = array<i64: 2>, scalar_prefetch = 0 : i64, scratch_operands = 2 : i64, tpu.core_type = #tpu.core_type<tc>, window_params = [{transform_indices = @transform_0, window_bounds = array<i64: 1, 16, 64>}, {pipeline_mode = #tpu.pipeline_mode<synchronous>, transform_indices = @transform_1, window_bounds = array<i64: 3, 64, 256>}, {pipeline_mode = #tpu.pipeline_mode<synchronous>, transform_indices = @transform_2, window_bounds = array<i64: 1, 256>}, {pipeline_mode = #tpu.pipeline_mode<synchronous>, transform_indices = @transform_3, window_bounds = array<i64: 3, 128, 128>}, {pipeline_mode = #tpu.pipeline_mode<synchronous>, transform_indices = @transform_4, window_bounds = array<i64: 1, 128>}, {transform_indices = @transform_5, window_bounds = array<i64: 1, 16, 128>}]} {
    %c0 = arith.constant 0 : index
    %c0_0 = arith.constant 0 : index
    %c0_1 = arith.constant 0 : index
    %0 = vector.load %arg1[%c0, %c0_0, %c0_1] : memref<1x16x64xf32, #tpu.memory_space<vmem>>, vector<1x16x64xf32>
    %cst = arith.constant 0.000000e+00 : f32
    %1 = vector.broadcast %cst : f32 to vector<1x1x64xf32>
    %c0_2 = arith.constant 0 : index
    %c0_3 = arith.constant 0 : index
    %c0_4 = arith.constant 0 : index
    %2 = vector.load %arg7[%c0_2, %c0_3, %c0_4] : memref<1x18x64xf32, #tpu.memory_space<vmem>>, vector<1x1x64xf32>
    tpu.vector_store %arg7[%c0_2, %c0_3, %c0_4], %1 {strides = array<i32>} : memref<1x18x64xf32, #tpu.memory_space<vmem>>, vector<1x1x64xf32>,
    %cst_5 = arith.constant 0.000000e+00 : f32
    %3 = vector.broadcast %cst_5 : f32 to vector<1x1x64xf32>
    %c0_6 = arith.constant 0 : index
    %c17 = arith.constant 17 : index
    %c0_7 = arith.constant 0 : index
    %4 = vector.load %arg7[%c0_6, %c17, %c0_7] : memref<1x18x64xf32, #tpu.memory_space<vmem>>, vector<1x1x64xf32>
    tpu.vector_store %arg7[%c0_6, %c17, %c0_7], %3 {strides = array<i32>} : memref<1x18x64xf32, #tpu.memory_space<vmem>>, vector<1x1x64xf32>,
    %c0_8 = arith.constant 0 : index
    %c1 = arith.constant 1 : index
    %c0_9 = arith.constant 0 : index
    %5 = vector.load %arg7[%c0_8, %c1, %c0_9] : memref<1x18x64xf32, #tpu.memory_space<vmem>>, vector<1x16x64xf32>
    tpu.vector_store %arg7[%c0_8, %c1, %c0_9], %0 {strides = array<i32>} : memref<1x18x64xf32, #tpu.memory_space<vmem>>, vector<1x16x64xf32>,
    %cst_10 = arith.constant 0.000000e+00 : f32
    %6 = vector.broadcast %cst_10 : f32 to vector<16x256xf32>
    %c0_11 = arith.constant 0 : index
    %c0_12 = arith.constant 0 : index
    %c0_13 = arith.constant 0 : index
    %7 = vector.load %arg7[%c0_11, %c0_12, %c0_13] : memref<1x18x64xf32, #tpu.memory_space<vmem>>, vector<1x16x64xf32>
    %8 = vector.shape_cast %7 : vector<1x16x64xf32> to vector<16x64xf32>
    %9 = arith.truncf %8 : vector<16x64xf32> to vector<16x64xbf16>
    %c0_14 = arith.constant 0 : index
    %c0_15 = arith.constant 0 : index
    %c0_16 = arith.constant 0 : index
    %10 = vector.load %arg2[%c0_14, %c0_15, %c0_16] : memref<3x64x256xbf16, #tpu.memory_space<vmem>>, vector<1x64x256xbf16>
    %11 = vector.shape_cast %10 : vector<1x64x256xbf16> to vector<64x256xbf16>
    %cst_17 = arith.constant dense<0.000000e+00> : vector<16x256xf32>
    %12 = tpu.matmul %9, %11, %cst_17 {dimension_numbers = #tpu.dot_dimension_numbers<[1], [0], [0], [1], [0, 0, 1, 1], [], []>} : vector<16x64xbf16>, vector<64x256xbf16>, vector<16x256xf32> -> vector<16x256xf32>
    %13 = arith.addf %6, %12 : vector<16x256xf32>
    %c0_18 = arith.constant 0 : index
    %c1_19 = arith.constant 1 : index
    %c0_20 = arith.constant 0 : index
    %14 = vector.load %arg7[%c0_18, %c1_19, %c0_20] : memref<1x18x64xf32, #tpu.memory_space<vmem>>, vector<1x16x64xf32>
    %15 = vector.shape_cast %14 : vector<1x16x64xf32> to vector<16x64xf32>
    %16 = arith.truncf %15 : vector<16x64xf32> to vector<16x64xbf16>
    %c1_21 = arith.constant 1 : index
    %c0_22 = arith.constant 0 : index
    %c0_23 = arith.constant 0 : index
    %17 = vector.load %arg2[%c1_21, %c0_22, %c0_23] : memref<3x64x256xbf16, #tpu.memory_space<vmem>>, vector<1x64x256xbf16>
    %18 = vector.shape_cast %17 : vector<1x64x256xbf16> to vector<64x256xbf16>
    %cst_24 = arith.constant dense<0.000000e+00> : vector<16x256xf32>
    %19 = tpu.matmul %16, %18, %cst_24 {dimension_numbers = #tpu.dot_dimension_numbers<[1], [0], [0], [1], [0, 0, 1, 1], [], []>} : vector<16x64xbf16>, vector<64x256xbf16>, vector<16x256xf32> -> vector<16x256xf32>
    %20 = arith.addf %13, %19 : vector<16x256xf32>
    %c0_25 = arith.constant 0 : index
    %c2 = arith.constant 2 : index
    %c0_26 = arith.constant 0 : index
    %21 = vector.load %arg7[%c0_25, %c2, %c0_26] : memref<1x18x64xf32, #tpu.memory_space<vmem>>, vector<1x16x64xf32>
    %22 = vector.shape_cast %21 : vector<1x16x64xf32> to vector<16x64xf32>
    %23 = arith.truncf %22 : vector<16x64xf32> to vector<16x64xbf16>
    %c2_27 = arith.constant 2 : index
    %c0_28 = arith.constant 0 : index
    %c0_29 = arith.constant 0 : index
    %24 = vector.load %arg2[%c2_27, %c0_28, %c0_29] : memref<3x64x256xbf16, #tpu.memory_space<vmem>>, vector<1x64x256xbf16>
    %25 = vector.shape_cast %24 : vector<1x64x256xbf16> to vector<64x256xbf16>
    %cst_30 = arith.constant dense<0.000000e+00> : vector<16x256xf32>
    %26 = tpu.matmul %23, %25, %cst_30 {dimension_numbers = #tpu.dot_dimension_numbers<[1], [0], [0], [1], [0, 0, 1, 1], [], []>} : vector<16x64xbf16>, vector<64x256xbf16>, vector<16x256xf32> -> vector<16x256xf32>
    %27 = arith.addf %20, %26 : vector<16x256xf32>
    %c0_31 = arith.constant 0 : index
    %c0_32 = arith.constant 0 : index
    %28 = vector.load %arg3[%c0_31, %c0_32] : memref<1x256xf32, #tpu.memory_space<vmem>>, vector<1x256xf32>
    %29 = vector.broadcast %28 : vector<1x256xf32> to vector<16x256xf32>
    %30 = arith.addf %27, %29 : vector<16x256xf32>
    %31 = vector.extract_strided_slice %30 {offsets = [0, 0], sizes = [16, 128], strides = [1, 1]} : vector<16x256xf32> to vector<16x128xf32>
    %cst_33 = arith.constant 0.000000e+00 : f32
    %32 = vector.broadcast %cst_33 : f32 to vector<16x128xf32>
    %33 = arith.maximumf %31, %32 : vector<16x128xf32>
    %34 = vector.extract_strided_slice %30 {offsets = [0, 128], sizes = [16, 128], strides = [1, 1]} : vector<16x256xf32> to vector<16x128xf32>
    %35 = vector.shape_cast %33 : vector<16x128xf32> to vector<1x16x128xf32>
    %cst_34 = arith.constant 0.000000e+00 : f32
    %36 = vector.broadcast %cst_34 : f32 to vector<1x1x128xf32>
    %c0_35 = arith.constant 0 : index
    %c0_36 = arith.constant 0 : index
    %c0_37 = arith.constant 0 : index
    %37 = vector.load %arg8[%c0_35, %c0_36, %c0_37] : memref<1x18x128xf32, #tpu.memory_space<vmem>>, vector<1x1x128xf32>
    tpu.vector_store %arg8[%c0_35, %c0_36, %c0_37], %36 {strides = array<i32>} : memref<1x18x128xf32, #tpu.memory_space<vmem>>, vector<1x1x128xf32>,
    %cst_38 = arith.constant 0.000000e+00 : f32
    %38 = vector.broadcast %cst_38 : f32 to vector<1x1x128xf32>
    %c0_39 = arith.constant 0 : index
    %c17_40 = arith.constant 17 : index
    %c0_41 = arith.constant 0 : index
    %39 = vector.load %arg8[%c0_39, %c17_40, %c0_41] : memref<1x18x128xf32, #tpu.memory_space<vmem>>, vector<1x1x128xf32>
    tpu.vector_store %arg8[%c0_39, %c17_40, %c0_41], %38 {strides = array<i32>} : memref<1x18x128xf32, #tpu.memory_space<vmem>>, vector<1x1x128xf32>,
    %c0_42 = arith.constant 0 : index
    %c1_43 = arith.constant 1 : index
    %c0_44 = arith.constant 0 : index
    %40 = vector.load %arg8[%c0_42, %c1_43, %c0_44] : memref<1x18x128xf32, #tpu.memory_space<vmem>>, vector<1x16x128xf32>
    tpu.vector_store %arg8[%c0_42, %c1_43, %c0_44], %35 {strides = array<i32>} : memref<1x18x128xf32, #tpu.memory_space<vmem>>, vector<1x16x128xf32>,
    %cst_45 = arith.constant 0.000000e+00 : f32
    %41 = vector.broadcast %cst_45 : f32 to vector<16x128xf32>
    %c0_46 = arith.constant 0 : index
    %c0_47 = arith.constant 0 : index
    %c0_48 = arith.constant 0 : index
    %42 = vector.load %arg8[%c0_46, %c0_47, %c0_48] : memref<1x18x128xf32, #tpu.memory_space<vmem>>, vector<1x16x128xf32>
    %43 = vector.shape_cast %42 : vector<1x16x128xf32> to vector<16x128xf32>
    %44 = arith.truncf %43 : vector<16x128xf32> to vector<16x128xbf16>
    %c0_49 = arith.constant 0 : index
    %c0_50 = arith.constant 0 : index
    %c0_51 = arith.constant 0 : index
    %45 = vector.load %arg4[%c0_49, %c0_50, %c0_51] : memref<3x128x128xbf16, #tpu.memory_space<vmem>>, vector<1x128x128xbf16>
    %46 = vector.shape_cast %45 : vector<1x128x128xbf16> to vector<128x128xbf16>
    %cst_52 = arith.constant dense<0.000000e+00> : vector<16x128xf32>
    %47 = tpu.matmul %44, %46, %cst_52 {dimension_numbers = #tpu.dot_dimension_numbers<[1], [0], [0], [1], [0, 0, 1, 1], [], []>} : vector<16x128xbf16>, vector<128x128xbf16>, vector<16x128xf32> -> vector<16x128xf32>
    %48 = arith.addf %41, %47 : vector<16x128xf32>
    %c0_53 = arith.constant 0 : index
    %c1_54 = arith.constant 1 : index
    %c0_55 = arith.constant 0 : index
    %49 = vector.load %arg8[%c0_53, %c1_54, %c0_55] : memref<1x18x128xf32, #tpu.memory_space<vmem>>, vector<1x16x128xf32>
    %50 = vector.shape_cast %49 : vector<1x16x128xf32> to vector<16x128xf32>
    %51 = arith.truncf %50 : vector<16x128xf32> to vector<16x128xbf16>
    %c1_56 = arith.constant 1 : index
    %c0_57 = arith.constant 0 : index
    %c0_58 = arith.constant 0 : index
    %52 = vector.load %arg4[%c1_56, %c0_57, %c0_58] : memref<3x128x128xbf16, #tpu.memory_space<vmem>>, vector<1x128x128xbf16>
    %53 = vector.shape_cast %52 : vector<1x128x128xbf16> to vector<128x128xbf16>
    %cst_59 = arith.constant dense<0.000000e+00> : vector<16x128xf32>
    %54 = tpu.matmul %51, %53, %cst_59 {dimension_numbers = #tpu.dot_dimension_numbers<[1], [0], [0], [1], [0, 0, 1, 1], [], []>} : vector<16x128xbf16>, vector<128x128xbf16>, vector<16x128xf32> -> vector<16x128xf32>
    %55 = arith.addf %48, %54 : vector<16x128xf32>
    %c0_60 = arith.constant 0 : index
    %c2_61 = arith.constant 2 : index
    %c0_62 = arith.constant 0 : index
    %56 = vector.load %arg8[%c0_60, %c2_61, %c0_62] : memref<1x18x128xf32, #tpu.memory_space<vmem>>, vector<1x16x128xf32>
    %57 = vector.shape_cast %56 : vector<1x16x128xf32> to vector<16x128xf32>
    %58 = arith.truncf %57 : vector<16x128xf32> to vector<16x128xbf16>
    %c2_63 = arith.constant 2 : index
    %c0_64 = arith.constant 0 : index
    %c0_65 = arith.constant 0 : index
    %59 = vector.load %arg4[%c2_63, %c0_64, %c0_65] : memref<3x128x128xbf16, #tpu.memory_space<vmem>>, vector<1x128x128xbf16>
    %60 = vector.shape_cast %59 : vector<1x128x128xbf16> to vector<128x128xbf16>
    %cst_66 = arith.constant dense<0.000000e+00> : vector<16x128xf32>
    %61 = tpu.matmul %58, %60, %cst_66 {dimension_numbers = #tpu.dot_dimension_numbers<[1], [0], [0], [1], [0, 0, 1, 1], [], []>} : vector<16x128xbf16>, vector<128x128xbf16>, vector<16x128xf32> -> vector<16x128xf32>
    %62 = arith.addf %55, %61 : vector<16x128xf32>
    %c0_67 = arith.constant 0 : index
    %c0_68 = arith.constant 0 : index
    %63 = vector.load %arg5[%c0_67, %c0_68] : memref<1x128xf32, #tpu.memory_space<vmem>>, vector<1x128xf32>
    %64 = vector.broadcast %63 : vector<1x128xf32> to vector<16x128xf32>
    %65 = arith.addf %62, %64 : vector<16x128xf32>
    %66 = arith.addf %65, %34 : vector<16x128xf32>
    %cst_69 = arith.constant 0.000000e+00 : f32
    %67 = vector.broadcast %cst_69 : f32 to vector<16x128xf32>
    %68 = arith.maximumf %66, %67 : vector<16x128xf32>
    %69 = vector.shape_cast %68 : vector<16x128xf32> to vector<1x16x128xf32>
    %c0_70 = arith.constant 0 : index
    %c0_71 = arith.constant 0 : index
    %c0_72 = arith.constant 0 : index
    %70 = vector.load %arg6[%c0_70, %c0_71, %c0_72] : memref<1x16x128xf32, #tpu.memory_space<vmem>>, vector<1x16x128xf32>
    tpu.vector_store %arg6[%c0_70, %c0_71, %c0_72], %69 {strides = array<i32>} : memref<1x16x128xf32, #tpu.memory_space<vmem>>, vector<1x16x128xf32>,
    return
  }
  func.func @transform_0(%arg0: i32) -> (i32, i32, i32) {
    %c0_i32 = arith.constant 0 : i32
    %c0_i32_0 = arith.constant 0 : i32
    %c0_i32_1 = arith.constant 0 : i32
    return %arg0, %c0_i32, %c0_i32_0 : i32, i32, i32
  }
  func.func @transform_1(%arg0: i32) -> (i32, i32, i32) {
    %c0_i32 = arith.constant 0 : i32
    %c0_i32_0 = arith.constant 0 : i32
    %c0_i32_1 = arith.constant 0 : i32
    %c0_i32_2 = arith.constant 0 : i32
    return %c0_i32, %c0_i32_0, %c0_i32_1 : i32, i32, i32
  }
  func.func @transform_2(%arg0: i32) -> (i32, i32) {
    %c0_i32 = arith.constant 0 : i32
    %c0_i32_0 = arith.constant 0 : i32
    %c0_i32_1 = arith.constant 0 : i32
    return %c0_i32, %c0_i32_0 : i32, i32
  }
  func.func @transform_3(%arg0: i32) -> (i32, i32, i32) {
    %c0_i32 = arith.constant 0 : i32
    %c0_i32_0 = arith.constant 0 : i32
    %c0_i32_1 = arith.constant 0 : i32
    %c0_i32_2 = arith.constant 0 : i32
    return %c0_i32, %c0_i32_0, %c0_i32_1 : i32, i32, i32
  }
  func.func @transform_4(%arg0: i32) -> (i32, i32) {
    %c0_i32 = arith.constant 0 : i32
    %c0_i32_0 = arith.constant 0 : i32
    %c0_i32_1 = arith.constant 0 : i32
    return %c0_i32, %c0_i32_0 : i32, i32
  }
  func.func @transform_5(%arg0: i32) -> (i32, i32, i32) {
    %c0_i32 = arith.constant 0 : i32
    %c0_i32_0 = arith.constant 0 : i32
    %c0_i32_1 = arith.constant 0 : i32
    return %arg0, %c0_i32, %c0_i32_0 : i32, i32, i32
  }
}

</mosaic_0001>

<llo_original>
// kernel: tpu_custom_call.1
$region0: #{tpu_custom_call.1}
  #allocation0 [shape = 'u32[]', space=smem, size = 0x4, offset = 0x4, fixed_abs, tag = 'smem constant byte address 0x4 - core index']
  #allocation1 [shape = 'u32[144,128]{1,0:T(1,128)}', space=vmem, size = 0x12000, scoped, tag = 'internal scratch']
  #allocation2 [shape = 'f32[1,18,64]{2,1,0:T(8,128)}', space=vmem, size = 0x3000, scoped, tag = 'scratch operand']
  #allocation3 [shape = 'f32[1,18,128]{2,1,0:T(8,128)}', space=vmem, size = 0x3000, scoped, tag = 'scratch operand']
  %s0 = inlined_call_operand.hbm [shape: f32[2,16,64], index: 0, kind: input, shape index: {}]
  %s1 = inlined_call_operand.hbm [shape: bf16[3,64,256], index: 1, kind: input, shape index: {}]
  %s2 = inlined_call_operand.vmem [shape: f32[1,256], index: 2, kind: input, shape index: {}]
  %s3 = inlined_call_operand.hbm [shape: bf16[3,128,128], index: 3, kind: input, shape index: {}]
  %s4 = inlined_call_operand.vmem [shape: f32[1,128], index: 4, kind: input, shape index: {}]
  %s5 = inlined_call_operand.hbm [shape: f32[2,16,128], index: 5, kind: output, shape index: {}]
  %s6 = sld [smem:[#allocation0]]
  $region65: #{tpu_custom_call.1} parent=0
    _
  %s8 = ssub.s32 1, %s6
  %s9 = scalar_select 0, %s8, %s6
  $region1: #{tpu_custom_call.1} parent=0
    #allocation4 [shape = 'u8[16384]{0}', space=vmem, size = 0x4000, scoped, tag = 'input window, operand 0']
    #allocation5 [shape = 's32[2]{0}', space=sflag, size = 0x8, scoped, tag = 'scoped memory for tpu_custom_call.1']
    #allocation6 [shape = 's32[2]{0}', space=sflag, size = 0x8, scoped, tag = 'scoped memory for tpu_custom_call.1']
    #allocation7 [shape = 'u8[98304]{0}', space=vmem, size = 0x18000, scoped, tag = 'input window, operand 1, single buffered']
    #allocation8 [shape = 's32[1]{0}', space=sflag, size = 0x4, scoped, tag = 'scoped memory for tpu_custom_call.1']
    #allocation9 [shape = 'u8[98304]{0}', space=vmem, size = 0x18000, scoped, tag = 'input window, operand 3, single buffered']
    #allocation10 [shape = 'u8[16384]{0}', space=vmem, size = 0x4000, scoped, tag = 'output window, operand 0']
    %10 = vsyncpa [#allocation5], 0
    %s11 = scalar_lea.sflag [#allocation5], 1
    %12 = vsyncpa %s11, 0
    %13 = vsyncpa [#allocation8], 0
    %14 = vsyncpa [#allocation6], 0
    %s15 = scalar_lea.sflag [#allocation6], 1
    %16 = vsyncpa %s15, 0
    loop: start=0, step=1, limit=4
    $region2: #{tpu_custom_call.1} parent=1 // loop_pre_header
      _
    $region3: #{tpu_custom_call.1} parent=1 // loop_header
      %s18 = sphi 0, %s22
      %p19 = scmp.ge.s32.totalorder %s18, 4
      %s28 = sphi 0, %s30
      %s31 = sphi 0, %s28
      %s32 = sphi 0, %s31
      %s48 = sphi 0, %s32
      %s52 = sphi 0, %s52
      %s54 = sphi 0, %s52
      %s55 = sphi 0, %s54
      %s69 = sphi 0, %s55
      %s73 = sphi 0, %s73
      %s75 = sphi 0, %s73
      %s76 = sphi 0, %s75
      %s90 = sphi 0, %s76
      %s94 = sphi 0, %s94
      %s96 = sphi 0, %s94
      %s97 = sphi 0, %s96
      %s111 = sphi 0, %s97
      %s115 = sphi 0, %s115
      %s117 = sphi 0, %s115
      %s118 = sphi 0, %s117
      %s132 = sphi 0, %s118
      %s138 = sphi 0, %s140
      %s141 = sphi 0, %s138
      %s142 = sphi 0, %s141
      %s158 = sphi 0, %s142
    $region4: #{tpu_custom_call.1} parent=1 // loop_header_branch
      %21 = sbr.rel (%p19) target = $region8
    $region5: #{tpu_custom_call.1} parent=1 // loop_body
      %s23 = ssub.s32 %s18, 1
      %s24 = ssub.s32 %s18, 2
      %s25 = sadd.s32 %s18, 1
      %s26 = ssub.s32 %s18, %s25
      %p27 = scmp.eq.s32.totalorder %s26, 0
      %s29 = sadd.s32 %s28, 1
      %s30 = scalar_select %p27, %s28, %s29
      %p33 = pneg %p27
      %p34 = scmp.eq.s32.totalorder %s18, 1
      %p35 = por %p33, %p34
      %p36 = scmp.ne.s32.totalorder %s28, %s31
      %p37 = scmp.eq.s32.totalorder %s18, 0
      %p38 = por %p36, %p37
      %p39 = scmp.ne.s32.totalorder %s28, %s31
      %p40 = scmp.eq.s32.totalorder %s23, 1
      %p41 = por %p39, %p40
      %p42 = scmp.ne.s32.totalorder %s31, %s32
      %p43 = scmp.eq.s32.totalorder %s23, 0
      %p44 = por %p42, %p43
      %p45 = scmp.ne.s32.totalorder %s31, %s32
      %p46 = scmp.eq.s32.totalorder %s24, 1
      %p47 = por %p45, %p46
      %p49 = scmp.ne.s32.totalorder %s32, %s48
      %p50 = scmp.eq.s32.totalorder %s24, 0
      %p51 = por %p49, %p50
      %s53 = sadd.s32 %s52, 1
      %p56 = scmp.eq.s32.totalorder %s18, 1
      %p57 = scmp.ne.s32.totalorder %s52, %s54
      %p58 = scmp.eq.s32.totalorder %s18, 0
      %p59 = por %p57, %p58
      %p60 = scmp.ne.s32.totalorder %s52, %s54
      %p61 = scmp.eq.s32.totalorder %s23, 1
      %p62 = por %p60, %p61
      %p63 = scmp.ne.s32.totalorder %s54, %s55
      %p64 = scmp.eq.s32.totalorder %s23, 0
      %p65 = por %p63, %p64
      %p66 = scmp.ne.s32.totalorder %s54, %s55
      %p67 = scmp.eq.s32.totalorder %s24, 1
      %p68 = por %p66, %p67
      %p70 = scmp.ne.s32.totalorder %s55, %s69
      %p71 = scmp.eq.s32.totalorder %s24, 0
      %p72 = por %p70, %p71
      %s74 = sadd.s32 %s73, 1
      %p77 = scmp.eq.s32.totalorder %s18, 1
      %p78 = scmp.ne.s32.totalorder %s73, %s75
      %p79 = scmp.eq.s32.totalorder %s18, 0
      %p80 = por %p78, %p79
      %p81 = scmp.ne.s32.totalorder %s73, %s75
      %p82 = scmp.eq.s32.totalorder %s23, 1
      %p83 = por %p81, %p82
      %p84 = scmp.ne.s32.totalorder %s75, %s76
      %p85 = scmp.eq.s32.totalorder %s23, 0
      %p86 = por %p84, %p85
      %p87 = scmp.ne.s32.totalorder %s75, %s76
      %p88 = scmp.eq.s32.totalorder %s24, 1
      %p89 = por %p87, %p88
      %p91 = scmp.ne.s32.totalorder %s76, %s90
      %p92 = scmp.eq.s32.totalorder %s24, 0
      %p93 = por %p91, %p92
      %s95 = sadd.s32 %s94, 1
      %p98 = scmp.eq.s32.totalorder %s18, 1
      %p99 = scmp.ne.s32.totalorder %s94, %s96
      %p100 = scmp.eq.s32.totalorder %s18, 0
      %p101 = por %p99, %p100
      %p102 = scmp.ne.s32.totalorder %s94, %s96
      %p103 = scmp.eq.s32.totalorder %s23, 1
      %p104 = por %p102, %p103
      %p105 = scmp.ne.s32.totalorder %s96, %s97
      %p106 = scmp.eq.s32.totalorder %s23, 0
      %p107 = por %p105, %p106
      %p108 = scmp.ne.s32.totalorder %s96, %s97
      %p109 = scmp.eq.s32.totalorder %s24, 1
      %p110 = por %p108, %p109
      %p112 = scmp.ne.s32.totalorder %s97, %s111
      %p113 = scmp.eq.s32.totalorder %s24, 0
      %p114 = por %p112, %p113
      %s116 = sadd.s32 %s115, 1
      %p119 = scmp.eq.s32.totalorder %s18, 1
      %p120 = scmp.ne.s32.totalorder %s115, %s117
      %p121 = scmp.eq.s32.totalorder %s18, 0
      %p122 = por %p120, %p121
      %p123 = scmp.ne.s32.totalorder %s115, %s117
      %p124 = scmp.eq.s32.totalorder %s23, 1
      %p125 = por %p123, %p124
      %p126 = scmp.ne.s32.totalorder %s117, %s118
      %p127 = scmp.eq.s32.totalorder %s23, 0
      %p128 = por %p126, %p127
      %p129 = scmp.ne.s32.totalorder %s117, %s118
      %p130 = scmp.eq.s32.totalorder %s24, 1
      %p131 = por %p129, %p130
      %p133 = scmp.ne.s32.totalorder %s118, %s132
      %p134 = scmp.eq.s32.totalorder %s24, 0
      %p135 = por %p133, %p134
      %s136 = ssub.s32 %s18, %s25
      %p137 = scmp.eq.s32.totalorder %s136, 0
      %s139 = sadd.s32 %s138, 1
      %s140 = scalar_select %p137, %s138, %s139
      %p143 = pneg %p137
      %p144 = scmp.eq.s32.totalorder %s18, 1
      %p145 = por %p143, %p144
      %p146 = scmp.ne.s32.totalorder %s138, %s141
      %p147 = scmp.eq.s32.totalorder %s18, 0
      %p148 = por %p146, %p147
      %p149 = scmp.ne.s32.totalorder %s138, %s141
      %p150 = scmp.eq.s32.totalorder %s23, 1
      %p151 = por %p149, %p150
      %p152 = scmp.ne.s32.totalorder %s141, %s142
      %p153 = scmp.eq.s32.totalorder %s23, 0
      %p154 = por %p152, %p153
      %p155 = scmp.ne.s32.totalorder %s141, %s142
      %p156 = scmp.eq.s32.totalorder %s24, 1
      %p157 = por %p155, %p156
      %p159 = scmp.ne.s32.totalorder %s142, %s158
      %p160 = scmp.eq.s32.totalorder %s24, 0
      %p161 = por %p159, %p160
      %p162 = scmp.le.s32.totalorder 1, %s18
      %p163 = scmp.lt.s32.totalorder %s18, 3
      %p164 = pnand %p162, %p163
      %p165 = pneg %p164
      // Predicated region
      $region9: #{tpu_custom_call.1} parent=5 // pred_check
        _
      $region10: #{tpu_custom_call.1} parent=5 // pred_check_branch
        %167 = sbr.rel (%p164) target = $region12
      $region11: #{tpu_custom_call.1} parent=5 // pred_region
        %s168 = ssub.s32 %s18, 1
        // Predicated region
        $region13: #{tpu_custom_call.1} parent=11 // pred_check
          %p169 = pneg %p65
        $region14: #{tpu_custom_call.1} parent=11 // pred_check_branch
          %171 = sbr.rel (%p169) target = $region16
        $region15: #{tpu_custom_call.1} parent=11 // pred_region
          %s173 = ssub.s32 3072, 3072
          %174 = vsyncadd [#allocation8], %s173
          %s175 = sshll.u32 [#allocation7], 4
          %s176 = int_to_ptr.vmem [resolvable:$true] %s175
          %181 = dma.hbm_to_vmem [thread:$0]  %s1, 3072, %s176, [#allocation8], 128, 128, 8
        $region16: #{tpu_custom_call.1} parent=11 // pred_fallthru
          _
        // Predicated region
        $region17: #{tpu_custom_call.1} parent=11 // pred_check
          %p182 = pneg %p86
        $region18: #{tpu_custom_call.1} parent=11 // pred_check_branch
          %184 = sbr.rel (%p182) target = $region20
        $region19: #{tpu_custom_call.1} parent=11 // pred_region
          _
        $region20: #{tpu_custom_call.1} parent=11 // pred_fallthru
          _
        // Predicated region
        $region21: #{tpu_custom_call.1} parent=11 // pred_check
          %p185 = pneg %p107
        $region22: #{tpu_custom_call.1} parent=11 // pred_check_branch
          %187 = sbr.rel (%p185) target = $region24
        $region23: #{tpu_custom_call.1} parent=11 // pred_region
          %s189 = ssub.s32 3072, 3072
          %190 = vsyncadd [#allocation8], %s189
          %s191 = sshll.u32 [#allocation9], 4
          %s192 = int_to_ptr.vmem [resolvable:$true] %s191
          %197 = dma.hbm_to_vmem [thread:$0]  %s3, 3072, %s192, [#allocation8], 64, 64, 4
        $region24: #{tpu_custom_call.1} parent=11 // pred_fallthru
          _
        // Predicated region
        $region25: #{tpu_custom_call.1} parent=11 // pred_check
          %p198 = pneg %p128
        $region26: #{tpu_custom_call.1} parent=11 // pred_check_branch
          %200 = sbr.rel (%p198) target = $region28
        $region27: #{tpu_custom_call.1} parent=11 // pred_region
          _
        $region28: #{tpu_custom_call.1} parent=11 // pred_fallthru
          _
      $region12: #{tpu_custom_call.1} parent=5 // pred_fallthru
        _
      %p201 = scmp.lt.s32.totalorder %s18, 2
      // Predicated region
      $region29: #{tpu_custom_call.1} parent=5 // pred_check
        %p202 = pneg %p201
      $region30: #{tpu_custom_call.1} parent=5 // pred_check_branch
        %204 = sbr.rel (%p202) target = $region32
      $region31: #{tpu_custom_call.1} parent=5 // pred_region
        // Predicated region
        $region33: #{tpu_custom_call.1} parent=31 // pred_check
          %p205 = pneg %p38
        $region34: #{tpu_custom_call.1} parent=31 // pred_check_branch
          %207 = sbr.rel (%p205) target = $region36
        $region35: #{tpu_custom_call.1} parent=31 // pred_region
          %s208 = sand.u32 %s28, 1
          %s209 = scalar_lea.sflag [#allocation5], %s208
          %s210 = sand.u32 %s28, 1
          %s211 = smul.addr %s210, 16
          %s212 = scalar_lea.vmem [#allocation4], %s211
          %s214 = ssub.s32 256, 256
          %215 = vsyncadd %s209, %s214
          %s216 = smul.addr %s18, 2
          %s217 = smul.addr %s216, 128
          %s218 = scalar_lea.hbm %s0, %s217
          %s219 = sshll.u32 %s212, 4
          %s220 = int_to_ptr.vmem [resolvable:$true] %s219
          %225 = dma.hbm_to_vmem [thread:$0]  %s218, 256, %s220, %s209, 128, 128, 8
        $region36: #{tpu_custom_call.1} parent=31 // pred_fallthru
          _
      $region32: #{tpu_custom_call.1} parent=5 // pred_fallthru
        _
      %p226 = scmp.le.s32.totalorder 1, %s18
      %p227 = scmp.lt.s32.totalorder %s18, 3
      %p228 = pnand %p226, %p227
      %p229 = pneg %p228
      // Predicated region
      $region37: #{tpu_custom_call.1} parent=5 // pred_check
        _
      $region38: #{tpu_custom_call.1} parent=5 // pred_check_branch
        %231 = sbr.rel (%p228) target = $region40
      $region39: #{tpu_custom_call.1} parent=5 // pred_region
        %s232 = ssub.s32 %s18, 1
        %s233 = sand.u32 %s31, 1
        %s234 = scalar_lea.sflag [#allocation5], %s233
        %s235 = sand.u32 %s31, 1
        %s236 = smul.addr %s235, 16
        %s237 = scalar_lea.vmem [#allocation4], %s236
        // Predicated region
        $region41: #{tpu_custom_call.1} parent=39 // pred_check
          %p238 = pneg %p44
        $region42: #{tpu_custom_call.1} parent=39 // pred_check_branch
          %240 = sbr.rel (%p238) target = $region44
        $region43: #{tpu_custom_call.1} parent=39 // pred_region
          %241 = dma.done %s234, 256
        $region44: #{tpu_custom_call.1} parent=39 // pred_fallthru
          _
        // Predicated region
        $region45: #{tpu_custom_call.1} parent=39 // pred_check
          %p242 = pneg %p65
        $region46: #{tpu_custom_call.1} parent=39 // pred_check_branch
          %244 = sbr.rel (%p242) target = $region48
        $region47: #{tpu_custom_call.1} parent=39 // pred_region
          %245 = dma.done [#allocation8], 3072
        $region48: #{tpu_custom_call.1} parent=39 // pred_fallthru
          _
        // Predicated region
        $region49: #{tpu_custom_call.1} parent=39 // pred_check
          %p246 = pneg %p107
        $region50: #{tpu_custom_call.1} parent=39 // pred_check_branch
          %248 = sbr.rel (%p246) target = $region52
        $region51: #{tpu_custom_call.1} parent=39 // pred_region
          %249 = dma.done [#allocation8], 3072
        $region52: #{tpu_custom_call.1} parent=39 // pred_fallthru
          _
        %s250 = sand.u32 %s31, 1
        %s251 = scalar_lea.sflag [#allocation5], %s250
        %s252 = sand.u32 %s31, 1
        %s253 = smul.addr %s252, 16
        %s254 = scalar_lea.vmem [#allocation4], %s253
        %p255 = pneg %p44
        %p256 = pneg %p41
        %p257 = pneg %p65
        %p258 = pneg %p62
        %p259 = pneg %p86
        %p260 = pneg %p83
        %p261 = pneg %p107
        %p262 = pneg %p104
        %p263 = pneg %p128
        %p264 = pneg %p125
        %p265 = pneg %p154
        %p266 = pneg %p151
        %s267 = sand.u32 %s141, 1
        %s268 = scalar_lea.sflag [#allocation6], %s267
        %s269 = sand.u32 %s141, 1
        %s270 = smul.addr %s269, 16
        %s271 = scalar_lea.vmem [#allocation10], %s270
        %v273 = vld [vmem:[%s237] sm:$0xff]
        %v274 = vld [vmem:[%s237 + $0x8] sm:$0xff]
        %vm275 = vcmask 516096
        %276 = vst.msk [vmem:[#allocation2] sm:$0x1] %vm275, 0.0
        %277 = vst.msk [vmem:[#allocation2 + $0x11] sm:$0x1] %vm275, 0.0
        %vm278 = vcmask 523264
        %279 = vst.msk [vmem:[#allocation2 + $0x1] sm:$0xff] %vm278, %v273
        %280 = vst.msk [vmem:[#allocation2 + $0x9] sm:$0xff] %vm278, %v274
        %v281 = vld [vmem:[#allocation2] sm:$0xff]
        %v282 = vld [vmem:[#allocation2 + $0x8] sm:$0xff]
        %v283 = vpack.c.bf16 %v282, %v281
        %v284 = vld [vmem:[#allocation7] sm:$0xff]
        %v285 = vld [vmem:[#allocation7 + $0x8] sm:$0xff]
        %v286 = vld [vmem:[#allocation7 + $0x10] sm:$0xff]
        %v287 = vld [vmem:[#allocation7 + $0x18] sm:$0xff]
        %v288 = vld [vmem:[#allocation7 + $0x20] sm:$0xff]
        %v289 = vld [vmem:[#allocation7 + $0x28] sm:$0xff]
        %v290 = vld [vmem:[#allocation7 + $0x30] sm:$0xff]
        %v291 = vld [vmem:[#allocation7 + $0x38] sm:$0xff]
        %v292 = vld [vmem:[#allocation2 + $0x1] sm:$0xff]
        %v293 = vld [vmem:[#allocation2 + $0x9] sm:$0xff]
        %v294 = vpack.c.bf16 %v293, %v292
        %s295 = scalar_lea.vmem [#allocation7], 64
        %v296 = vld [vmem:[%s295] sm:$0xff]
        %v297 = vld [vmem:[%s295 + $0x8] sm:$0xff]
        %v298 = vld [vmem:[%s295 + $0x10] sm:$0xff]
        %v299 = vld [vmem:[%s295 + $0x18] sm:$0xff]
        %v300 = vld [vmem:[%s295 + $0x20] sm:$0xff]
        %v301 = vld [vmem:[%s295 + $0x28] sm:$0xff]
        %v302 = vld [vmem:[%s295 + $0x30] sm:$0xff]
        %v303 = vld [vmem:[%s295 + $0x38] sm:$0xff]
        %v312 = vunpack.c.l.b16 %v296
        %v313 = vunpack.c.h.b16 %v296
        %v314 = vunpack.c.l.b16 %v297
        %v315 = vunpack.c.h.b16 %v297
        %v316 = vunpack.c.l.b16 %v298
        %v317 = vunpack.c.h.b16 %v298
        %v318 = vunpack.c.l.b16 %v299
        %v319 = vunpack.c.h.b16 %v299
        %v320 = vunpack.c.l.b16 %v300
        %v321 = vunpack.c.h.b16 %v300
        %v322 = vunpack.c.l.b16 %v301
        %v323 = vunpack.c.h.b16 %v301
        %v324 = vunpack.c.l.b16 %v302
        %v325 = vunpack.c.h.b16 %v302
        %v326 = vunpack.c.l.b16 %v303
        %v327 = vunpack.c.h.b16 %v303
        %v328 = vpack.c.b16 %v314, %v312
        %v329 = vpack.c.b16 %v315, %v313
        %v330 = vpack.c.b16 %v318, %v316
        %v331 = vpack.c.b16 %v319, %v317
        %v332 = vpack.c.b16 %v322, %v320
        %v333 = vpack.c.b16 %v323, %v321
        %v334 = vpack.c.b16 %v326, %v324
        %v335 = vpack.c.b16 %v327, %v325
        %v345 = vsel %vm278, %v294, 0
        %347 = vmatprep.subr.bf16.mxu0 %v329
        %348 = vmatpush1.bf16.msra.mxu0 %v328
        %349 = vmatprep.subr.bf16.mxu0 %v331
        %350 = vmatpush1.bf16.msra.mxu0 %v330
        %351 = vmatprep.subr.bf16.mxu0 %v333
        %352 = vmatpush1.bf16.msra.mxu0 %v332
        %353 = vmatprep.subr.bf16.mxu0 %v335
        %354 = vmatpush1.bf16.msra.mxu0 %v334
        %355 = vmatprep.subr.bf16.mxu0 0
        %356 = vmatpush1.bf16.msra.mxu0 0
        %357 = vmatprep.subr.bf16.mxu0 0
        %358 = vmatpush1.bf16.msra.mxu0 0
        %359 = vmatprep.subr.bf16.mxu0 0
        %360 = vmatpush1.bf16.msra.mxu0 0
        %361 = vmatprep.subr.bf16.mxu0 0
        %362 = vmatpush1.bf16.msra.mxu0 0
        %363 = vmatprep.subr.bf16.mxu0 0
        %364 = vmatpush1.bf16.msra.mxu0 0
        %365 = vmatprep.subr.bf16.mxu0 0
        %366 = vmatpush1.bf16.msra.mxu0 0
        %367 = vmatprep.subr.bf16.mxu0 0
        %368 = vmatpush1.bf16.msra.mxu0 0
        %369 = vmatprep.subr.bf16.mxu0 0
        %370 = vmatpush1.bf16.msra.mxu0 0
        %371 = vmatprep.subr.bf16.mxu0 0
        %372 = vmatpush1.bf16.msra.mxu0 0
        %373 = vmatprep.subr.bf16.mxu0 0
        %374 = vmatpush1.bf16.msra.mxu0 0
        %375 = vmatprep.subr.bf16.mxu0 0
        %376 = vmatpush1.bf16.msra.mxu0 0
        %377 = vmatprep.subr.bf16.mxu0 0
        %378 = vmatpush1.bf16.msra.mxu0 0
        %379 = vmatprep.mubr.bf16.mxu0 0
        %380 = vmatmul.mubr.bf16.gmra.mrb[0].mxu0 %v345
        %v381 = vpop.f32.mrb[0].mxu0
        %v382 = vadd.f32 0.0, %v381
        %v383 = vpop.f32.mrb[0].mxu0
        %v384 = vadd.f32 0.0, %v383
        %v385 = vpop.f32.mrb[0].mxu0
        %v386 = vadd.f32 0.0, %v385
        %v387 = vpop.f32.mrb[0].mxu0
        %v388 = vadd.f32 0.0, %v387
        %389 = vdwg.mxu0
        %v398 = vunpack.c.l.b16 %v284
        %v399 = vunpack.c.h.b16 %v284
        %v400 = vunpack.c.l.b16 %v285
        %v401 = vunpack.c.h.b16 %v285
        %v402 = vunpack.c.l.b16 %v286
        %v403 = vunpack.c.h.b16 %v286
        %v404 = vunpack.c.l.b16 %v287
        %v405 = vunpack.c.h.b16 %v287
        %v406 = vunpack.c.l.b16 %v288
        %v407 = vunpack.c.h.b16 %v288
        %v408 = vunpack.c.l.b16 %v289
        %v409 = vunpack.c.h.b16 %v289
        %v410 = vunpack.c.l.b16 %v290
        %v411 = vunpack.c.h.b16 %v290
        %v412 = vunpack.c.l.b16 %v291
        %v413 = vunpack.c.h.b16 %v291
        %v414 = vpack.c.b16 %v400, %v398
        %v415 = vpack.c.b16 %v401, %v399
        %v416 = vpack.c.b16 %v404, %v402
        %v417 = vpack.c.b16 %v405, %v403
        %v418 = vpack.c.b16 %v408, %v406
        %v419 = vpack.c.b16 %v409, %v407
        %v420 = vpack.c.b16 %v412, %v410
        %v421 = vpack.c.b16 %v413, %v411
        %v431 = vsel %vm278, %v283, 0
        %433 = vmatprep.subr.bf16.mxu0 %v415
        %434 = vmatpush1.bf16.msra.mxu0 %v414
        %435 = vmatprep.subr.bf16.mxu0 %v417
        %436 = vmatpush1.bf16.msra.mxu0 %v416
        %437 = vmatprep.subr.bf16.mxu0 %v419
        %438 = vmatpush1.bf16.msra.mxu0 %v418
        %439 = vmatprep.subr.bf16.mxu0 %v421
        %440 = vmatpush1.bf16.msra.mxu0 %v420
        %441 = vmatprep.subr.bf16.mxu0 0
        %442 = vmatpush1.bf16.msra.mxu0 0
        %443 = vmatprep.subr.bf16.mxu0 0
        %444 = vmatpush1.bf16.msra.mxu0 0
        %445 = vmatprep.subr.bf16.mxu0 0
        %446 = vmatpush1.bf16.msra.mxu0 0
        %447 = vmatprep.subr.bf16.mxu0 0
        %448 = vmatpush1.bf16.msra.mxu0 0
        %449 = vmatprep.subr.bf16.mxu0 0
        %450 = vmatpush1.bf16.msra.mxu0 0
        %451 = vmatprep.subr.bf16.mxu0 0
        %452 = vmatpush1.bf16.msra.mxu0 0
        %453 = vmatprep.subr.bf16.mxu0 0
        %454 = vmatpush1.bf16.msra.mxu0 0
        %455 = vmatprep.subr.bf16.mxu0 0
        %456 = vmatpush1.bf16.msra.mxu0 0
        %457 = vmatprep.subr.bf16.mxu0 0
        %458 = vmatpush1.bf16.msra.mxu0 0
        %459 = vmatprep.subr.bf16.mxu0 0
        %460 = vmatpush1.bf16.msra.mxu0 0
        %461 = vmatprep.subr.bf16.mxu0 0
        %462 = vmatpush1.bf16.msra.mxu0 0
        %463 = vmatprep.subr.bf16.mxu0 0
        %464 = vmatpush1.bf16.msra.mxu0 0
        %465 = vmatprep.mubr.bf16.mxu0 0
        %466 = vmatmul.mubr.bf16.gmra.mrb[0].mxu0 %v431
        %v467 = vpop.f32.mrb[0].mxu0
        %v468 = vadd.f32 %v382, %v467
        %v469 = vpop.f32.mrb[0].mxu0
        %v470 = vadd.f32 %v384, %v469
        %v471 = vpop.f32.mrb[0].mxu0
        %v472 = vadd.f32 %v386, %v471
        %v473 = vpop.f32.mrb[0].mxu0
        %v474 = vadd.f32 %v388, %v473
        %475 = vdwg.mxu0
        %v476 = vld [vmem:[#allocation2 + $0x2] sm:$0xff]
        %v477 = vld [vmem:[#allocation2 + $0xa] sm:$0xff]
        %v478 = vpack.c.bf16 %v477, %v476
        %s479 = scalar_lea.vmem [#allocation7], 128
        %v480 = vld [vmem:[%s479] sm:$0xff]
        %v481 = vld [vmem:[%s479 + $0x8] sm:$0xff]
        %v482 = vld [vmem:[%s479 + $0x10] sm:$0xff]
        %v483 = vld [vmem:[%s479 + $0x18] sm:$0xff]
        %v484 = vld [vmem:[%s479 + $0x20] sm:$0xff]
        %v485 = vld [vmem:[%s479 + $0x28] sm:$0xff]
        %v486 = vld [vmem:[%s479 + $0x30] sm:$0xff]
        %v487 = vld [vmem:[%s479 + $0x38] sm:$0xff]
        %v496 = vunpack.c.l.b16 %v480
        %v497 = vunpack.c.h.b16 %v480
        %v498 = vunpack.c.l.b16 %v481
        %v499 = vunpack.c.h.b16 %v481
        %v500 = vunpack.c.l.b16 %v482
        %v501 = vunpack.c.h.b16 %v482
        %v502 = vunpack.c.l.b16 %v483
        %v503 = vunpack.c.h.b16 %v483
        %v504 = vunpack.c.l.b16 %v484
        %v505 = vunpack.c.h.b16 %v484
        %v506 = vunpack.c.l.b16 %v485
        %v507 = vunpack.c.h.b16 %v485
        %v508 = vunpack.c.l.b16 %v486
        %v509 = vunpack.c.h.b16 %v486
        %v510 = vunpack.c.l.b16 %v487
        %v511 = vunpack.c.h.b16 %v487
        %v512 = vpack.c.b16 %v498, %v496
        %v513 = vpack.c.b16 %v499, %v497
        %v514 = vpack.c.b16 %v502, %v500
        %v515 = vpack.c.b16 %v503, %v501
        %v516 = vpack.c.b16 %v506, %v504
        %v517 = vpack.c.b16 %v507, %v505
        %v518 = vpack.c.b16 %v510, %v508
        %v519 = vpack.c.b16 %v511, %v509
        %v529 = vsel %vm278, %v478, 0
        %531 = vmatprep.subr.bf16.mxu0 %v513
        %532 = vmatpush1.bf16.msra.mxu0 %v512
        %533 = vmatprep.subr.bf16.mxu0 %v515
        %534 = vmatpush1.bf16.msra.mxu0 %v514
        %535 = vmatprep.subr.bf16.mxu0 %v517
        %536 = vmatpush1.bf16.msra.mxu0 %v516
        %537 = vmatprep.subr.bf16.mxu0 %v519
        %538 = vmatpush1.bf16.msra.mxu0 %v518
        %539 = vmatprep.subr.bf16.mxu0 0
        %540 = vmatpush1.bf16.msra.mxu0 0
        %541 = vmatprep.subr.bf16.mxu0 0
        %542 = vmatpush1.bf16.msra.mxu0 0
        %543 = vmatprep.subr.bf16.mxu0 0
        %544 = vmatpush1.bf16.msra.mxu0 0
        %545 = vmatprep.subr.bf16.mxu0 0
        %546 = vmatpush1.bf16.msra.mxu0 0
        %547 = vmatprep.subr.bf16.mxu0 0
        %548 = vmatpush1.bf16.msra.mxu0 0
        %549 = vmatprep.subr.bf16.mxu0 0
        %550 = vmatpush1.bf16.msra.mxu0 0
        %551 = vmatprep.subr.bf16.mxu0 0
        %552 = vmatpush1.bf16.msra.mxu0 0
        %553 = vmatprep.subr.bf16.mxu0 0
        %554 = vmatpush1.bf16.msra.mxu0 0
        %555 = vmatprep.subr.bf16.mxu0 0
        %556 = vmatpush1.bf16.msra.mxu0 0
        %557 = vmatprep.subr.bf16.mxu0 0
        %558 = vmatpush1.bf16.msra.mxu0 0
        %559 = vmatprep.subr.bf16.mxu0 0
        %560 = vmatpush1.bf16.msra.mxu0 0
        %561 = vmatprep.subr.bf16.mxu0 0
        %562 = vmatpush1.bf16.msra.mxu0 0
        %563 = vmatprep.mubr.bf16.mxu0 0
        %564 = vmatmul.mubr.bf16.gmra.mrb[0].mxu0 %v529
        %v565 = vpop.f32.mrb[0].mxu0
        %v566 = vadd.f32 0.0, %v565
        %v567 = vpop.f32.mrb[0].mxu0
        %v568 = vadd.f32 0.0, %v567
        %v569 = vpop.f32.mrb[0].mxu0
        %v570 = vadd.f32 0.0, %v569
        %v571 = vpop.f32.mrb[0].mxu0
        %v572 = vadd.f32 0.0, %v571
        %573 = vdwg.mxu0
        %v574 = vadd.f32 %v468, %v566
        %v575 = vadd.f32 %v470, %v568
        %v576 = vadd.f32 %v472, %v570
        %v577 = vadd.f32 %v474, %v572
        %v578 = vld [vmem:[%s2] sm:$0x3]
        %v580 = vlaneseq
        %v581 = vshrl.u32 %v580, 7
        %v582 = vsub.s32 0, %v581
        %v583 = vrot.slane %v578, %v582
        %v584 = vlaneseq
        %v585 = vshrl.u32 %v584, 7
        %v586 = vsub.s32 1, %v585
        %v587 = vrot.slane %v578, %v586
        %v590 = vadd.f32 %v574, %v583
        %v591 = vadd.f32 %v575, %v587
        %v592 = vadd.f32 %v576, %v583
        %v593 = vadd.f32 %v577, %v587
        %v594 = vmax.f32 %v590, 0.0
        %v595 = vmax.f32 %v592, 0.0
        %596 = vst [vmem:[#allocation3] sm:$0x1] 0.0
        %597 = vst [vmem:[#allocation3 + $0x11] sm:$0x1] 0.0
        %598 = vst [vmem:[#allocation3 + $0x1] sm:$0xff] %v594
        %599 = vst [vmem:[#allocation3 + $0x9] sm:$0xff] %v595
        %v600 = vld [vmem:[#allocation3] sm:$0xff]
        %v601 = vld [vmem:[#allocation3 + $0x8] sm:$0xff]
        %v602 = vpack.c.bf16 %v601, %v600
        %v603 = vld [vmem:[#allocation9] sm:$0xf]
        %v604 = vld [vmem:[#allocation9 + $0x4] sm:$0xf]
        %v605 = vld [vmem:[#allocation9 + $0x8] sm:$0xf]
        %v606 = vld [vmem:[#allocation9 + $0xc] sm:$0xf]
        %v607 = vld [vmem:[#allocation9 + $0x10] sm:$0xf]
        %v608 = vld [vmem:[#allocation9 + $0x14] sm:$0xf]
        %v609 = vld [vmem:[#allocation9 + $0x18] sm:$0xf]
        %v610 = vld [vmem:[#allocation9 + $0x1c] sm:$0xf]
        %v611 = vld [vmem:[#allocation9 + $0x20] sm:$0xf]
        %v612 = vld [vmem:[#allocation9 + $0x24] sm:$0xf]
        %v613 = vld [vmem:[#allocation9 + $0x28] sm:$0xf]
        %v614 = vld [vmem:[#allocation9 + $0x2c] sm:$0xf]
        %v615 = vld [vmem:[#allocation9 + $0x30] sm:$0xf]
        %v616 = vld [vmem:[#allocation9 + $0x34] sm:$0xf]
        %v617 = vld [vmem:[#allocation9 + $0x38] sm:$0xf]
        %v618 = vld [vmem:[#allocation9 + $0x3c] sm:$0xf]
        %v619 = vld [vmem:[#allocation3 + $0x1] sm:$0xff]
        %v620 = vld [vmem:[#allocation3 + $0x9] sm:$0xff]
        %v621 = vpack.c.bf16 %v620, %v619
        %s622 = scalar_lea.vmem [#allocation9], 64
        %v623 = vld [vmem:[%s622] sm:$0xf]
        %v624 = vld [vmem:[%s622 + $0x4] sm:$0xf]
        %v625 = vld [vmem:[%s622 + $0x8] sm:$0xf]
        %v626 = vld [vmem:[%s622 + $0xc] sm:$0xf]
        %v627 = vld [vmem:[%s622 + $0x10] sm:$0xf]
        %v628 = vld [vmem:[%s622 + $0x14] sm:$0xf]
        %v629 = vld [vmem:[%s622 + $0x18] sm:$0xf]
        %v630 = vld [vmem:[%s622 + $0x1c] sm:$0xf]
        %v631 = vld [vmem:[%s622 + $0x20] sm:$0xf]
        %v632 = vld [vmem:[%s622 + $0x24] sm:$0xf]
        %v633 = vld [vmem:[%s622 + $0x28] sm:$0xf]
        %v634 = vld [vmem:[%s622 + $0x2c] sm:$0xf]
        %v635 = vld [vmem:[%s622 + $0x30] sm:$0xf]
        %v636 = vld [vmem:[%s622 + $0x34] sm:$0xf]
        %v637 = vld [vmem:[%s622 + $0x38] sm:$0xf]
        %v638 = vld [vmem:[%s622 + $0x3c] sm:$0xf]
        %v655 = vunpack.c.l.b16 %v623
        %v656 = vunpack.c.l.b16 %v624
        %v657 = vunpack.c.l.b16 %v625
        %v658 = vunpack.c.l.b16 %v626
        %v659 = vunpack.c.l.b16 %v627
        %v660 = vunpack.c.l.b16 %v628
        %v661 = vunpack.c.l.b16 %v629
        %v662 = vunpack.c.l.b16 %v630
        %v663 = vunpack.c.l.b16 %v631
        %v664 = vunpack.c.l.b16 %v632
        %v665 = vunpack.c.l.b16 %v633
        %v666 = vunpack.c.l.b16 %v634
        %v667 = vunpack.c.l.b16 %v635
        %v668 = vunpack.c.l.b16 %v636
        %v669 = vunpack.c.l.b16 %v637
        %v670 = vunpack.c.l.b16 %v638
        %v671 = vpack.c.b16 %v656, %v655
        %v672 = vpack.c.b16 %v658, %v657
        %v673 = vpack.c.b16 %v660, %v659
        %v674 = vpack.c.b16 %v662, %v661
        %v675 = vpack.c.b16 %v664, %v663
        %v676 = vpack.c.b16 %v666, %v665
        %v677 = vpack.c.b16 %v668, %v667
        %v678 = vpack.c.b16 %v670, %v669
        %687 = vmatprep.subr.bf16.mxu0 0
        %688 = vmatpush1.bf16.msra.mxu0 %v671
        %689 = vmatprep.subr.bf16.mxu0 0
        %690 = vmatpush1.bf16.msra.mxu0 %v672
        %691 = vmatprep.subr.bf16.mxu0 0
        %692 = vmatpush1.bf16.msra.mxu0 %v673
        %693 = vmatprep.subr.bf16.mxu0 0
        %694 = vmatpush1.bf16.msra.mxu0 %v674
        %695 = vmatprep.subr.bf16.mxu0 0
        %696 = vmatpush1.bf16.msra.mxu0 %v675
        %697 = vmatprep.subr.bf16.mxu0 0
        %698 = vmatpush1.bf16.msra.mxu0 %v676
        %699 = vmatprep.subr.bf16.mxu0 0
        %700 = vmatpush1.bf16.msra.mxu0 %v677
        %701 = vmatprep.subr.bf16.mxu0 0
        %702 = vmatpush1.bf16.msra.mxu0 %v678
        %703 = vmatprep.subr.bf16.mxu0 0
        %704 = vmatpush1.bf16.msra.mxu0 0
        %705 = vmatprep.subr.bf16.mxu0 0
        %706 = vmatpush1.bf16.msra.mxu0 0
        %707 = vmatprep.subr.bf16.mxu0 0
        %708 = vmatpush1.bf16.msra.mxu0 0
        %709 = vmatprep.subr.bf16.mxu0 0
        %710 = vmatpush1.bf16.msra.mxu0 0
        %711 = vmatprep.subr.bf16.mxu0 0
        %712 = vmatpush1.bf16.msra.mxu0 0
        %713 = vmatprep.subr.bf16.mxu0 0
        %714 = vmatpush1.bf16.msra.mxu0 0
        %715 = vmatprep.subr.bf16.mxu0 0
        %716 = vmatpush1.bf16.msra.mxu0 0
        %717 = vmatprep.subr.bf16.mxu0 0
        %718 = vmatpush1.bf16.msra.mxu0 0
        %719 = vmatprep.mubr.bf16.mxu0 0
        %720 = vmatmul.mubr.bf16.gmra.mrb[0].mxu0 %v621
        %v721 = vpop.f32.mrb[0].mxu0
        %v722 = vadd.f32 0.0, %v721
        %v723 = vpop.f32.mrb[0].mxu0
        %v724 = vpop.f32.mrb[0].mxu0
        %v725 = vadd.f32 0.0, %v724
        %v726 = vpop.f32.mrb[0].mxu0
        %727 = vdwg.mxu0
        %v744 = vunpack.c.l.b16 %v603
        %v745 = vunpack.c.l.b16 %v604
        %v746 = vunpack.c.l.b16 %v605
        %v747 = vunpack.c.l.b16 %v606
        %v748 = vunpack.c.l.b16 %v607
        %v749 = vunpack.c.l.b16 %v608
        %v750 = vunpack.c.l.b16 %v609
        %v751 = vunpack.c.l.b16 %v610
        %v752 = vunpack.c.l.b16 %v611
        %v753 = vunpack.c.l.b16 %v612
        %v754 = vunpack.c.l.b16 %v613
        %v755 = vunpack.c.l.b16 %v614
        %v756 = vunpack.c.l.b16 %v615
        %v757 = vunpack.c.l.b16 %v616
        %v758 = vunpack.c.l.b16 %v617
        %v759 = vunpack.c.l.b16 %v618
        %v760 = vpack.c.b16 %v745, %v744
        %v761 = vpack.c.b16 %v747, %v746
        %v762 = vpack.c.b16 %v749, %v748
        %v763 = vpack.c.b16 %v751, %v750
        %v764 = vpack.c.b16 %v753, %v752
        %v765 = vpack.c.b16 %v755, %v754
        %v766 = vpack.c.b16 %v757, %v756
        %v767 = vpack.c.b16 %v759, %v758
        %776 = vmatprep.subr.bf16.mxu0 0
        %777 = vmatpush1.bf16.msra.mxu0 %v760
        %778 = vmatprep.subr.bf16.mxu0 0
        %779 = vmatpush1.bf16.msra.mxu0 %v761
        %780 = vmatprep.subr.bf16.mxu0 0
        %781 = vmatpush1.bf16.msra.mxu0 %v762
        %782 = vmatprep.subr.bf16.mxu0 0
        %783 = vmatpush1.bf16.msra.mxu0 %v763
        %784 = vmatprep.subr.bf16.mxu0 0
        %785 = vmatpush1.bf16.msra.mxu0 %v764
        %786 = vmatprep.subr.bf16.mxu0 0
        %787 = vmatpush1.bf16.msra.mxu0 %v765
        %788 = vmatprep.subr.bf16.mxu0 0
        %789 = vmatpush1.bf16.msra.mxu0 %v766
        %790 = vmatprep.subr.bf16.mxu0 0
        %791 = vmatpush1.bf16.msra.mxu0 %v767
        %792 = vmatprep.subr.bf16.mxu0 0
        %793 = vmatpush1.bf16.msra.mxu0 0
        %794 = vmatprep.subr.bf16.mxu0 0
        %795 = vmatpush1.bf16.msra.mxu0 0
        %796 = vmatprep.subr.bf16.mxu0 0
        %797 = vmatpush1.bf16.msra.mxu0 0
        %798 = vmatprep.subr.bf16.mxu0 0
        %799 = vmatpush1.bf16.msra.mxu0 0
        %800 = vmatprep.subr.bf16.mxu0 0
        %801 = vmatpush1.bf16.msra.mxu0 0
        %802 = vmatprep.subr.bf16.mxu0 0
        %803 = vmatpush1.bf16.msra.mxu0 0
        %804 = vmatprep.subr.bf16.mxu0 0
        %805 = vmatpush1.bf16.msra.mxu0 0
        %806 = vmatprep.subr.bf16.mxu0 0
        %807 = vmatpush1.bf16.msra.mxu0 0
        %808 = vmatprep.mubr.bf16.mxu0 0
        %809 = vmatmul.mubr.bf16.gmra.mrb[0].mxu0 %v602
        %v810 = vpop.f32.mrb[0].mxu0
        %v811 = vadd.f32 %v722, %v810
        %v812 = vpop.f32.mrb[0].mxu0
        %v813 = vpop.f32.mrb[0].mxu0
        %v814 = vadd.f32 %v725, %v813
        %v815 = vpop.f32.mrb[0].mxu0
        %816 = vdwg.mxu0
        %v817 = vld [vmem:[#allocation3 + $0x2] sm:$0xff]
        %v818 = vld [vmem:[#allocation3 + $0xa] sm:$0xff]
        %v819 = vpack.c.bf16 %v818, %v817
        %s820 = scalar_lea.vmem [#allocation9], 128
        %v821 = vld [vmem:[%s820] sm:$0xf]
        %v822 = vld [vmem:[%s820 + $0x4] sm:$0xf]
        %v823 = vld [vmem:[%s820 + $0x8] sm:$0xf]
        %v824 = vld [vmem:[%s820 + $0xc] sm:$0xf]
        %v825 = vld [vmem:[%s820 + $0x10] sm:$0xf]
        %v826 = vld [vmem:[%s820 + $0x14] sm:$0xf]
        %v827 = vld [vmem:[%s820 + $0x18] sm:$0xf]
        %v828 = vld [vmem:[%s820 + $0x1c] sm:$0xf]
        %v829 = vld [vmem:[%s820 + $0x20] sm:$0xf]
        %v830 = vld [vmem:[%s820 + $0x24] sm:$0xf]
        %v831 = vld [vmem:[%s820 + $0x28] sm:$0xf]
        %v832 = vld [vmem:[%s820 + $0x2c] sm:$0xf]
        %v833 = vld [vmem:[%s820 + $0x30] sm:$0xf]
        %v834 = vld [vmem:[%s820 + $0x34] sm:$0xf]
        %v835 = vld [vmem:[%s820 + $0x38] sm:$0xf]
        %v836 = vld [vmem:[%s820 + $0x3c] sm:$0xf]
        %v853 = vunpack.c.l.b16 %v821
        %v854 = vunpack.c.l.b16 %v822
        %v855 = vunpack.c.l.b16 %v823
        %v856 = vunpack.c.l.b16 %v824
        %v857 = vunpack.c.l.b16 %v825
        %v858 = vunpack.c.l.b16 %v826
        %v859 = vunpack.c.l.b16 %v827
        %v860 = vunpack.c.l.b16 %v828
        %v861 = vunpack.c.l.b16 %v829
        %v862 = vunpack.c.l.b16 %v830
        %v863 = vunpack.c.l.b16 %v831
        %v864 = vunpack.c.l.b16 %v832
        %v865 = vunpack.c.l.b16 %v833
        %v866 = vunpack.c.l.b16 %v834
        %v867 = vunpack.c.l.b16 %v835
        %v868 = vunpack.c.l.b16 %v836
        %v869 = vpack.c.b16 %v854, %v853
        %v870 = vpack.c.b16 %v856, %v855
        %v871 = vpack.c.b16 %v858, %v857
        %v872 = vpack.c.b16 %v860, %v859
        %v873 = vpack.c.b16 %v862, %v861
        %v874 = vpack.c.b16 %v864, %v863
        %v875 = vpack.c.b16 %v866, %v865
        %v876 = vpack.c.b16 %v868, %v867
        %885 = vmatprep.subr.bf16.mxu0 0
        %886 = vmatpush1.bf16.msra.mxu0 %v869
        %887 = vmatprep.subr.bf16.mxu0 0
        %888 = vmatpush1.bf16.msra.mxu0 %v870
        %889 = vmatprep.subr.bf16.mxu0 0
        %890 = vmatpush1.bf16.msra.mxu0 %v871
        %891 = vmatprep.subr.bf16.mxu0 0
        %892 = vmatpush1.bf16.msra.mxu0 %v872
        %893 = vmatprep.subr.bf16.mxu0 0
        %894 = vmatpush1.bf16.msra.mxu0 %v873
        %895 = vmatprep.subr.bf16.mxu0 0
        %896 = vmatpush1.bf16.msra.mxu0 %v874
        %897 = vmatprep.subr.bf16.mxu0 0
        %898 = vmatpush1.bf16.msra.mxu0 %v875
        %899 = vmatprep.subr.bf16.mxu0 0
        %900 = vmatpush1.bf16.msra.mxu0 %v876
        %901 = vmatprep.subr.bf16.mxu0 0
        %902 = vmatpush1.bf16.msra.mxu0 0
        %903 = vmatprep.subr.bf16.mxu0 0
        %904 = vmatpush1.bf16.msra.mxu0 0
        %905 = vmatprep.subr.bf16.mxu0 0
        %906 = vmatpush1.bf16.msra.mxu0 0
        %907 = vmatprep.subr.bf16.mxu0 0
        %908 = vmatpush1.bf16.msra.mxu0 0
        %909 = vmatprep.subr.bf16.mxu0 0
        %910 = vmatpush1.bf16.msra.mxu0 0
        %911 = vmatprep.subr.bf16.mxu0 0
        %912 = vmatpush1.bf16.msra.mxu0 0
        %913 = vmatprep.subr.bf16.mxu0 0
        %914 = vmatpush1.bf16.msra.mxu0 0
        %915 = vmatprep.subr.bf16.mxu0 0
        %916 = vmatpush1.bf16.msra.mxu0 0
        %917 = vmatprep.mubr.bf16.mxu0 0
        %918 = vmatmul.mubr.bf16.gmra.mrb[0].mxu0 %v819
        %v919 = vpop.f32.mrb[0].mxu0
        %v920 = vadd.f32 0.0, %v919
        %v921 = vpop.f32.mrb[0].mxu0
        %v922 = vpop.f32.mrb[0].mxu0
        %v923 = vadd.f32 0.0, %v922
        %v924 = vpop.f32.mrb[0].mxu0
        %925 = vdwg.mxu0
        %v926 = vadd.f32 %v811, %v920
        %v927 = vadd.f32 %v814, %v923
        %v928 = vld [vmem:[%s4] sm:$0x1]
        %v930 = vlaneseq
        %v931 = vshrl.u32 %v930, 7
        %v932 = vsub.s32 0, %v931
        %v933 = vrot.slane %v928, %v932
        %v935 = vadd.f32 %v926, %v933
        %v936 = vadd.f32 %v927, %v933
        %v937 = vadd.f32 %v935, %v591
        %v938 = vadd.f32 %v936, %v593
        %v939 = vmax.f32 %v937, 0.0
        %v940 = vmax.f32 %v938, 0.0
        %941 = vst [vmem:[%s271] sm:$0xff] %v939
        %942 = vst [vmem:[%s271 + $0x8] sm:$0xff] %v940
        %s943 = sand.u32 %s141, 1
        %s944 = scalar_lea.sflag [#allocation6], %s943
        %s945 = sand.u32 %s141, 1
        %s946 = smul.addr %s945, 16
        %s947 = scalar_lea.vmem [#allocation10], %s946
        // Predicated region
        $region53: #{tpu_custom_call.1} parent=39 // pred_check
          %p948 = pneg %p151
        $region54: #{tpu_custom_call.1} parent=39 // pred_check_branch
          %950 = sbr.rel (%p948) target = $region56
        $region55: #{tpu_custom_call.1} parent=39 // pred_region
          %s952 = ssub.s32 256, 256
          %953 = vsyncadd %s944, %s952
          %s954 = smul.addr %s23, 2
          %s955 = smul.addr %s954, 128
          %s956 = scalar_lea.hbm %s5, %s955
          %s957 = sshll.u32 %s947, 4
          %s958 = int_to_ptr.vmem [resolvable:$true] %s957
          %963 = dma.vmem_to_hbm [thread:$0]  %s958, 256, %s956, %s944, 128, 128, 8
        $region56: #{tpu_custom_call.1} parent=39 // pred_fallthru
          _
      $region40: #{tpu_custom_call.1} parent=5 // pred_fallthru
        _
      %p964 = scmp.le.s32.totalorder 2, %s18
      // Predicated region
      $region57: #{tpu_custom_call.1} parent=5 // pred_check
        %p965 = pneg %p964
      $region58: #{tpu_custom_call.1} parent=5 // pred_check_branch
        %967 = sbr.rel (%p965) target = $region60
      $region59: #{tpu_custom_call.1} parent=5 // pred_region
        %s968 = ssub.s32 %s18, 2
        // Predicated region
        $region61: #{tpu_custom_call.1} parent=59 // pred_check
          %p969 = pneg %p157
        $region62: #{tpu_custom_call.1} parent=59 // pred_check_branch
          %971 = sbr.rel (%p969) target = $region64
        $region63: #{tpu_custom_call.1} parent=59 // pred_region
          %s972 = sand.u32 %s142, 1
          %s973 = scalar_lea.sflag [#allocation6], %s972
          %s974 = sand.u32 %s142, 1
          %s975 = smul.addr %s974, 16
          %s976 = scalar_lea.vmem [#allocation10], %s975
          %977 = dma.done %s973, 256
        $region64: #{tpu_custom_call.1} parent=59 // pred_fallthru
          _
      $region60: #{tpu_custom_call.1} parent=5 // pred_fallthru
        _
    $region6: #{tpu_custom_call.1} parent=1 // loop_footer
      %s22 = sadd.s32 1, %s18
    $region7: #{tpu_custom_call.1} parent=1 // loop_footer_branch
      %17 = sbr.rel target = $region3
    $region8: #{tpu_custom_call.1} parent=1 // loop_exit
      _
    %978 = vsyncpa [#allocation5], 1
    %s979 = scalar_lea.sflag [#allocation5], 1
    %980 = vsyncpa %s979, 1
    %981 = vsyncpa [#allocation8], 1
    %982 = vsyncpa [#allocation6], 1
    %s983 = scalar_lea.sflag [#allocation6], 1
    %984 = vsyncpa %s983, 1

</llo_original>
